<compile_context>
chip_gen: v6e
topology: v6e:2x2x1
jax: 0.10.0
libtpu: 0.0.40
codegen_flags: <defaults>
</compile_context>

<pallas_src>
import jax
import jax.numpy as jnp
from jax.experimental import pallas as pl
from jax.experimental.pallas import tpu as pltpu

EPSILON = 1e-5

_LANE = 1024                            # lane width (multiple of 128)
_SUBLANE = 8
_TARGET_BLOCK_BYTES = 2 * 1024 * 1024   # ~2 MiB per input block (v7x-safe)
_NUM_PARALLEL = 2                       # leading 'parallel' grid axis
_NEG_BIG = -1e9                         # sigmoid(-1e9) == 0.0 exactly


def _round_up(x, m):
    return (x + m - 1) // m * m


def _dice_partials_kernel(p_ref, t_ref, inter_ref, union_ref):
    k = pl.program_id(1)

    @pl.when(k == 0)
    def _():
        inter_ref[...] = jnp.zeros_like(inter_ref)
        union_ref[...] = jnp.zeros_like(union_ref)

    pre = jax.nn.sigmoid(p_ref[...].astype(jnp.float32))
    tar = t_ref[...].astype(jnp.float32)

    blk_rows, lane = pre.shape
    # Fold rows into groups of 8 sublanes: the axis-0 sums below are pure
    # sublane-aligned VPU adds (no cross-lane XLU reduce in the hot loop).
    pre_f = pre.reshape(blk_rows // _SUBLANE, _SUBLANE, lane)
    tar_f = tar.reshape(blk_rows // _SUBLANE, _SUBLANE, lane)

    inter_ref[0] += jnp.sum(pre_f * tar_f, axis=0)
    # union = sum(pre) + sum(tar); never materialize full-tile (pre + tar).
    union_ref[0] += jnp.sum(pre_f, axis=0) + jnp.sum(tar_f, axis=0)


def dice_loss(predict, target):
    assert predict.shape == target.shape, (
        "the size of predict and target must be equal."
    )

    total = 1
    for d in predict.shape:
        total *= d

    lane = _LANE
    rows = pl.cdiv(total, lane)

    # Block rows: ~2 MiB per input block, shrunk (and 8-aligned) for small
    # inputs so padding stays minimal.
    blk_cap = max(
        _SUBLANE,
        (_TARGET_BLOCK_BYTES // (lane * 4)) // _SUBLANE * _SUBLANE,
    )
    blk_rows = min(blk_cap, _round_up(pl.cdiv(rows, _NUM_PARALLEL), _SUBLANE))
    rows_pad = _round_up(rows, blk_rows * _NUM_PARALLEL)
    pad = rows_pad * lane - total

    # Padding is inert: sigmoid(-1e9) == 0 and target pad == 0.
    p2 = jnp.pad(predict.reshape(-1), (0, pad),
                 constant_values=_NEG_BIG).reshape(rows_pad, lane)
    t2 = jnp.pad(target.reshape(-1), (0, pad),
                 constant_values=0).reshape(rows_pad, lane)

    num_k = rows_pad // (blk_rows * _NUM_PARALLEL)

    def in_map(p, k, _nk=num_k):
        return (p * _nk + k, 0)

    part_spec = pl.BlockSpec((1, _SUBLANE, lane), lambda p, k: (p, 0, 0))
    part_shape = jax.ShapeDtypeStruct(
        (_NUM_PARALLEL, _SUBLANE, lane), jnp.float32)

    inter_parts, union_parts = pl.pallas_call(
        _dice_partials_kernel,
        out_shape=(part_shape, part_shape),
        grid_spec=pltpu.PrefetchScalarGridSpec(
            num_scalar_prefetch=0,
            grid=(_NUM_PARALLEL, num_k),
            in_specs=[
                pl.BlockSpec((blk_rows, lane), in_map),
                pl.BlockSpec((blk_rows, lane), in_map),
            ],
            out_specs=(part_spec, part_spec),
        ),
        compiler_params=pltpu.CompilerParams(
            dimension_semantics=("parallel", "arbitrary"),
            vmem_limit_bytes=32 * 1024 * 1024,
        ),
    )(p2, t2)

    intersection = jnp.sum(inter_parts)
    union = jnp.sum(union_parts)
    eps = jnp.float32(EPSILON)
    return jnp.float32(1.0) - jnp.float32(2.0) * (intersection + eps) / (
        union + eps)


def dice_loss_ref(predict, target):
    num = predict.shape[0]
    pre = jax.nn.sigmoid(predict.astype(jnp.float32)).reshape(num, -1)
    tar = target.astype(jnp.float32).reshape(num, -1)
    intersection = (pre * tar).sum(-1).sum()
    union = (pre + tar).sum(-1).sum()
    return 1.0 - 2.0 * (intersection + EPSILON) / (union + EPSILON)


if __name__ == "__main__":
    key = jax.random.PRNGKey(0)
    k1, k2 = jax.random.split(key)

    # Small NCHW shapes: batch=2, channels=4, spatial=16x16.
    predict = jax.random.normal(k1, (2, 4, 16, 16), dtype=jnp.float32)
    # Binary target, as typical for Dice loss.
    target = (jax.random.uniform(k2, (2, 4, 16, 16)) > 0.5).astype(jnp.float32)

    score = dice_loss(predict, target)
    jax.block_until_ready(score)

    ref = dice_loss_ref(predict, target)
    assert jnp.allclose(score, ref, atol=1e-5, rtol=1e-5), (score, ref)

    print("KERNEL_OK")
</pallas_src>

<mosaic_0001>
module attributes {stable_mosaic.version = 11 : i64} {
  func.func @_dice_partials_kernel(%arg0: i32, %arg1: i32, %arg2: memref<8x1024xf32, #tpu.memory_space<vmem>>, %arg3: memref<8x1024xf32, #tpu.memory_space<vmem>>, %arg4: memref<1x8x1024xf32, #tpu.memory_space<vmem>>, %arg5: memref<1x8x1024xf32, #tpu.memory_space<vmem>>) attributes {dimension_semantics = [#tpu.dimension_semantics<parallel>, #tpu.dimension_semantics<arbitrary>], iteration_bounds = array<i64: 2, 1>, scalar_prefetch = 0 : i64, scratch_operands = 0 : i64, tpu.core_type = #tpu.core_type<tc>, window_params = [{transform_indices = @transform_0, window_bounds = array<i64: 8, 1024>}, {transform_indices = @transform_1, window_bounds = array<i64: 8, 1024>}, {transform_indices = @transform_2, window_bounds = array<i64: 1, 8, 1024>}, {transform_indices = @transform_3, window_bounds = array<i64: 1, 8, 1024>}]} {
    %c0_i32 = arith.constant 0 : i32
    %0 = arith.cmpi eq, %arg1, %c0_i32 : i32
    %1 = arith.extui %0 : i1 to i32
    %c0_i32_0 = arith.constant 0 : i32
    %2 = arith.cmpi ne, %1, %c0_i32_0 : i32
    scf.if %2 {
      %cst_19 = arith.constant 0.000000e+00 : f32
      %29 = vector.broadcast %cst_19 : f32 to vector<1x8x1024xf32>
      %c0_20 = arith.constant 0 : index
      %c0_21 = arith.constant 0 : index
      %c0_22 = arith.constant 0 : index
      %30 = vector.load %arg4[%c0_20, %c0_21, %c0_22] : memref<1x8x1024xf32, #tpu.memory_space<vmem>>, vector<1x8x1024xf32>
      tpu.vector_store %arg4[%c0_20, %c0_21, %c0_22], %29 {strides = array<i32>} : memref<1x8x1024xf32, #tpu.memory_space<vmem>>, vector<1x8x1024xf32>,
      %cst_23 = arith.constant 0.000000e+00 : f32
      %31 = vector.broadcast %cst_23 : f32 to vector<1x8x1024xf32>
      %c0_24 = arith.constant 0 : index
      %c0_25 = arith.constant 0 : index
      %c0_26 = arith.constant 0 : index
      %32 = vector.load %arg5[%c0_24, %c0_25, %c0_26] : memref<1x8x1024xf32, #tpu.memory_space<vmem>>, vector<1x8x1024xf32>
      tpu.vector_store %arg5[%c0_24, %c0_25, %c0_26], %31 {strides = array<i32>} : memref<1x8x1024xf32, #tpu.memory_space<vmem>>, vector<1x8x1024xf32>,
    } else {
    }
    %c0 = arith.constant 0 : index
    %c0_1 = arith.constant 0 : index
    %3 = vector.load %arg2[%c0, %c0_1] : memref<8x1024xf32, #tpu.memory_space<vmem>>, vector<8x1024xf32>
    %4 = arith.negf %3 : vector<8x1024xf32>
    %5 = math.exp %4 : vector<8x1024xf32>
    %cst = arith.constant 1.000000e+00 : f32
    %6 = vector.broadcast %cst : f32 to vector<8x1024xf32>
    %7 = arith.addf %6, %5 : vector<8x1024xf32>
    %8 = arith.divf %6, %7 : vector<8x1024xf32>
    %c0_2 = arith.constant 0 : index
    %c0_3 = arith.constant 0 : index
    %9 = vector.load %arg3[%c0_2, %c0_3] : memref<8x1024xf32, #tpu.memory_space<vmem>>, vector<8x1024xf32>
    %10 = vector.shape_cast %8 : vector<8x1024xf32> to vector<1x8x1024xf32>
    %11 = vector.shape_cast %9 : vector<8x1024xf32> to vector<1x8x1024xf32>
    %c0_4 = arith.constant 0 : index
    %c0_5 = arith.constant 0 : index
    %c0_6 = arith.constant 0 : index
    %12 = vector.load %arg4[%c0_4, %c0_5, %c0_6] : memref<1x8x1024xf32, #tpu.memory_space<vmem>>, vector<1x8x1024xf32>
    %13 = vector.shape_cast %12 : vector<1x8x1024xf32> to vector<8x1024xf32>
    %14 = arith.mulf %10, %11 : vector<1x8x1024xf32>
    %cst_7 = arith.constant dense<0.000000e+00> : vector<8x1024xf32>
    %15 = vector.multi_reduction <add>, %14, %cst_7 [0] : vector<1x8x1024xf32> to vector<8x1024xf32>
    %16 = arith.addf %13, %15 : vector<8x1024xf32>
    %c0_8 = arith.constant 0 : index
    %c0_9 = arith.constant 0 : index
    %c0_10 = arith.constant 0 : index
    %17 = vector.load %arg4[%c0_8, %c0_9, %c0_10] : memref<1x8x1024xf32, #tpu.memory_space<vmem>>, vector<1x8x1024xf32>
    %18 = vector.shape_cast %17 : vector<1x8x1024xf32> to vector<8x1024xf32>
    %19 = vector.shape_cast %16 : vector<8x1024xf32> to vector<1x8x1024xf32>
    tpu.vector_store %arg4[%c0_8, %c0_9, %c0_10], %19 {strides = array<i32>} : memref<1x8x1024xf32, #tpu.memory_space<vmem>>, vector<1x8x1024xf32>,
    %c0_11 = arith.constant 0 : index
    %c0_12 = arith.constant 0 : index
    %c0_13 = arith.constant 0 : index
    %20 = vector.load %arg5[%c0_11, %c0_12, %c0_13] : memref<1x8x1024xf32, #tpu.memory_space<vmem>>, vector<1x8x1024xf32>
    %21 = vector.shape_cast %20 : vector<1x8x1024xf32> to vector<8x1024xf32>
    %cst_14 = arith.constant dense<0.000000e+00> : vector<8x1024xf32>
    %22 = vector.multi_reduction <add>, %10, %cst_14 [0] : vector<1x8x1024xf32> to vector<8x1024xf32>
    %cst_15 = arith.constant dense<0.000000e+00> : vector<8x1024xf32>
    %23 = vector.multi_reduction <add>, %11, %cst_15 [0] : vector<1x8x1024xf32> to vector<8x1024xf32>
    %24 = arith.addf %22, %23 : vector<8x1024xf32>
    %25 = arith.addf %21, %24 : vector<8x1024xf32>
    %c0_16 = arith.constant 0 : index
    %c0_17 = arith.constant 0 : index
    %c0_18 = arith.constant 0 : index
    %26 = vector.load %arg5[%c0_16, %c0_17, %c0_18] : memref<1x8x1024xf32, #tpu.memory_space<vmem>>, vector<1x8x1024xf32>
    %27 = vector.shape_cast %26 : vector<1x8x1024xf32> to vector<8x1024xf32>
    %28 = vector.shape_cast %25 : vector<8x1024xf32> to vector<1x8x1024xf32>
    tpu.vector_store %arg5[%c0_16, %c0_17, %c0_18], %28 {strides = array<i32>} : memref<1x8x1024xf32, #tpu.memory_space<vmem>>, vector<1x8x1024xf32>,
    return
  }
  func.func @transform_0(%arg0: i32, %arg1: i32) -> (i32, i32) {
    %c1_i32 = arith.constant 1 : i32
    %0 = arith.muli %arg0, %c1_i32 : i32
    %1 = arith.addi %0, %arg1 : i32
    %c0_i32 = arith.constant 0 : i32
    %c0_i32_0 = arith.constant 0 : i32
    return %1, %c0_i32 : i32, i32
  }
  func.func @transform_1(%arg0: i32, %arg1: i32) -> (i32, i32) {
    %c1_i32 = arith.constant 1 : i32
    %0 = arith.muli %arg0, %c1_i32 : i32
    %1 = arith.addi %0, %arg1 : i32
    %c0_i32 = arith.constant 0 : i32
    %c0_i32_0 = arith.constant 0 : i32
    return %1, %c0_i32 : i32, i32
  }
  func.func @transform_2(%arg0: i32, %arg1: i32) -> (i32, i32, i32) {
    %c0_i32 = arith.constant 0 : i32
    %c0_i32_0 = arith.constant 0 : i32
    %c0_i32_1 = arith.constant 0 : i32
    return %arg0, %c0_i32, %c0_i32_0 : i32, i32, i32
  }
  func.func @transform_3(%arg0: i32, %arg1: i32) -> (i32, i32, i32) {
    %c0_i32 = arith.constant 0 : i32
    %c0_i32_0 = arith.constant 0 : i32
    %c0_i32_1 = arith.constant 0 : i32
    return %arg0, %c0_i32, %c0_i32_0 : i32, i32, i32
  }
}

</mosaic_0001>

<llo_original>
// kernel: tpu_custom_call.1
$region0: #{tpu_custom_call.1}
  #allocation0 [shape = 'u32[]', space=smem, size = 0x4, offset = 0x4, fixed_abs, tag = 'smem constant byte address 0x4 - core index']
  #allocation1 [shape = 'u32[144,128]{1,0:T(1,128)}', space=vmem, size = 0x12000, scoped, tag = 'internal scratch']
  %s0 = inlined_call_operand.hbm [shape: f32[16,1024], index: 0, kind: input, shape index: {}]
  %s1 = inlined_call_operand.hbm [shape: f32[16,1024], index: 1, kind: input, shape index: {}]
  %s2 = inlined_call_operand.hbm [shape: f32[2,8,1024], index: 2, kind: output, shape index: {0}]
  %s3 = inlined_call_operand.hbm [shape: f32[2,8,1024], index: 3, kind: output, shape index: {1}]
  %4 = xla_tuple %s2, %s3
  %s5 = sld [smem:[#allocation0]]
  $region61: #{tpu_custom_call.1} parent=0
    _
  %s7 = ssub.s32 1, %s5
  %s8 = scalar_select 0, %s7, %s5
  $region1: #{tpu_custom_call.1} parent=0
    #allocation2 [shape = 'u8[65536]{0}', space=vmem, size = 0x10000, scoped, tag = 'input window, operand 0']
    #allocation3 [shape = 's32[2]{0}', space=sflag, size = 0x8, scoped, tag = 'scoped memory for tpu_custom_call.1']
    #allocation4 [shape = 's32[2]{0}', space=sflag, size = 0x8, scoped, tag = 'scoped memory for tpu_custom_call.1']
    #allocation5 [shape = 'u8[65536]{0}', space=vmem, size = 0x10000, scoped, tag = 'input window, operand 1']
    #allocation6 [shape = 's32[2]{0}', space=sflag, size = 0x8, scoped, tag = 'scoped memory for tpu_custom_call.1']
    #allocation7 [shape = 'u8[65536]{0}', space=vmem, size = 0x10000, scoped, tag = 'output window, operand 0']
    #allocation8 [shape = 'u8[65536]{0}', space=vmem, size = 0x10000, scoped, tag = 'output window, operand 1']
    #allocation9 [shape = 's32[2]{0}', space=sflag, size = 0x8, scoped, tag = 'scoped memory for tpu_custom_call.1']
    %9 = vsyncpa [#allocation3], 0
    %s10 = scalar_lea.sflag [#allocation3], 1
    %11 = vsyncpa %s10, 0
    %12 = vsyncpa [#allocation6], 0
    %s13 = scalar_lea.sflag [#allocation6], 1
    %14 = vsyncpa %s13, 0
    %15 = vsyncpa [#allocation4], 0
    %s16 = scalar_lea.sflag [#allocation4], 1
    %17 = vsyncpa %s16, 0
    %18 = vsyncpa [#allocation9], 0
    %s19 = scalar_lea.sflag [#allocation9], 1
    %20 = vsyncpa %s19, 0
    loop: start=0, step=1, limit=4
    $region2: #{tpu_custom_call.1} parent=1 // loop_pre_header
      _
    $region3: #{tpu_custom_call.1} parent=1 // loop_header
      %s22 = sphi 0, %s26
      %p23 = scmp.ge.s32.totalorder %s22, 4
      %s29 = sphi 0, %s41
      %s30 = sphi 0, %s37
      %s31 = sphi 0, %s29
      %s32 = sphi 0, %s30
      %s33 = sphi 0, %s31
      %s34 = sphi 0, %s32
      %s46 = sphi 0, %s48
      %s49 = sphi 0, %s46
      %s50 = sphi 0, %s49
      %s66 = sphi 0, %s50
      %s74 = sphi 0, %s76
      %s77 = sphi 0, %s74
      %s78 = sphi 0, %s77
      %s94 = sphi 0, %s78
      %s100 = sphi 0, %s102
      %s103 = sphi 0, %s100
      %s104 = sphi 0, %s103
      %s120 = sphi 0, %s104
      %s126 = sphi 0, %s128
      %s129 = sphi 0, %s126
      %s130 = sphi 0, %s129
      %s146 = sphi 0, %s130
    $region4: #{tpu_custom_call.1} parent=1 // loop_header_branch
      %25 = sbr.rel (%p23) target = $region8
    $region5: #{tpu_custom_call.1} parent=1 // loop_body
      %s27 = ssub.s32 %s22, 1
      %s28 = ssub.s32 %s22, 2
      %s35 = sadd.s32 1, %s30
      %p36 = scmp.ge.s32.totalorder %s35, 1
      %s37 = scalar_select %p36, 0, %s35
      %s38 = sadd.s32 1, %s29
      %s39 = scalar_select %p36, %s38, %s29
      %p40 = scmp.ge.s32.totalorder %s39, 2
      %s41 = scalar_select %p40, 0, %s39
      %s42 = sadd.s32 %s29, %s30
      %s43 = sadd.s32 %s41, %s37
      %s44 = ssub.s32 %s42, %s43
      %p45 = scmp.eq.s32.totalorder %s44, 0
      %s47 = sadd.s32 %s46, 1
      %s48 = scalar_select %p45, %s46, %s47
      %p51 = pneg %p45
      %p52 = scmp.eq.s32.totalorder %s22, 1
      %p53 = por %p51, %p52
      %p54 = scmp.ne.s32.totalorder %s46, %s49
      %p55 = scmp.eq.s32.totalorder %s22, 0
      %p56 = por %p54, %p55
      %p57 = scmp.ne.s32.totalorder %s46, %s49
      %p58 = scmp.eq.s32.totalorder %s27, 1
      %p59 = por %p57, %p58
      %p60 = scmp.ne.s32.totalorder %s49, %s50
      %p61 = scmp.eq.s32.totalorder %s27, 0
      %p62 = por %p60, %p61
      %p63 = scmp.ne.s32.totalorder %s49, %s50
      %p64 = scmp.eq.s32.totalorder %s28, 1
      %p65 = por %p63, %p64
      %p67 = scmp.ne.s32.totalorder %s50, %s66
      %p68 = scmp.eq.s32.totalorder %s28, 0
      %p69 = por %p67, %p68
      %s70 = sadd.s32 %s29, %s30
      %s71 = sadd.s32 %s41, %s37
      %s72 = ssub.s32 %s70, %s71
      %p73 = scmp.eq.s32.totalorder %s72, 0
      %s75 = sadd.s32 %s74, 1
      %s76 = scalar_select %p73, %s74, %s75
      %p79 = pneg %p73
      %p80 = scmp.eq.s32.totalorder %s22, 1
      %p81 = por %p79, %p80
      %p82 = scmp.ne.s32.totalorder %s74, %s77
      %p83 = scmp.eq.s32.totalorder %s22, 0
      %p84 = por %p82, %p83
      %p85 = scmp.ne.s32.totalorder %s74, %s77
      %p86 = scmp.eq.s32.totalorder %s27, 1
      %p87 = por %p85, %p86
      %p88 = scmp.ne.s32.totalorder %s77, %s78
      %p89 = scmp.eq.s32.totalorder %s27, 0
      %p90 = por %p88, %p89
      %p91 = scmp.ne.s32.totalorder %s77, %s78
      %p92 = scmp.eq.s32.totalorder %s28, 1
      %p93 = por %p91, %p92
      %p95 = scmp.ne.s32.totalorder %s78, %s94
      %p96 = scmp.eq.s32.totalorder %s28, 0
      %p97 = por %p95, %p96
      %s98 = ssub.s32 %s29, %s41
      %p99 = scmp.eq.s32.totalorder %s98, 0
      %s101 = sadd.s32 %s100, 1
      %s102 = scalar_select %p99, %s100, %s101
      %p105 = pneg %p99
      %p106 = scmp.eq.s32.totalorder %s22, 1
      %p107 = por %p105, %p106
      %p108 = scmp.ne.s32.totalorder %s100, %s103
      %p109 = scmp.eq.s32.totalorder %s22, 0
      %p110 = por %p108, %p109
      %p111 = scmp.ne.s32.totalorder %s100, %s103
      %p112 = scmp.eq.s32.totalorder %s27, 1
      %p113 = por %p111, %p112
      %p114 = scmp.ne.s32.totalorder %s103, %s104
      %p115 = scmp.eq.s32.totalorder %s27, 0
      %p116 = por %p114, %p115
      %p117 = scmp.ne.s32.totalorder %s103, %s104
      %p118 = scmp.eq.s32.totalorder %s28, 1
      %p119 = por %p117, %p118
      %p121 = scmp.ne.s32.totalorder %s104, %s120
      %p122 = scmp.eq.s32.totalorder %s28, 0
      %p123 = por %p121, %p122
      %s124 = ssub.s32 %s29, %s41
      %p125 = scmp.eq.s32.totalorder %s124, 0
      %s127 = sadd.s32 %s126, 1
      %s128 = scalar_select %p125, %s126, %s127
      %p131 = pneg %p125
      %p132 = scmp.eq.s32.totalorder %s22, 1
      %p133 = por %p131, %p132
      %p134 = scmp.ne.s32.totalorder %s126, %s129
      %p135 = scmp.eq.s32.totalorder %s22, 0
      %p136 = por %p134, %p135
      %p137 = scmp.ne.s32.totalorder %s126, %s129
      %p138 = scmp.eq.s32.totalorder %s27, 1
      %p139 = por %p137, %p138
      %p140 = scmp.ne.s32.totalorder %s129, %s130
      %p141 = scmp.eq.s32.totalorder %s27, 0
      %p142 = por %p140, %p141
      %p143 = scmp.ne.s32.totalorder %s129, %s130
      %p144 = scmp.eq.s32.totalorder %s28, 1
      %p145 = por %p143, %p144
      %p147 = scmp.ne.s32.totalorder %s130, %s146
      %p148 = scmp.eq.s32.totalorder %s28, 0
      %p149 = por %p147, %p148
      %p150 = scmp.le.s32.totalorder 1, %s22
      %p151 = scmp.lt.s32.totalorder %s22, 3
      %p152 = pnand %p150, %p151
      %p153 = pneg %p152
      // Predicated region
      $region9: #{tpu_custom_call.1} parent=5 // pred_check
        _
      $region10: #{tpu_custom_call.1} parent=5 // pred_check_branch
        %155 = sbr.rel (%p152) target = $region12
      $region11: #{tpu_custom_call.1} parent=5 // pred_region
        %s156 = ssub.s32 %s22, 1
      $region12: #{tpu_custom_call.1} parent=5 // pred_fallthru
        _
      %p157 = scmp.lt.s32.totalorder %s22, 2
      // Predicated region
      $region13: #{tpu_custom_call.1} parent=5 // pred_check
        %p158 = pneg %p157
      $region14: #{tpu_custom_call.1} parent=5 // pred_check_branch
        %160 = sbr.rel (%p158) target = $region16
      $region15: #{tpu_custom_call.1} parent=5 // pred_region
        // Predicated region
        $region17: #{tpu_custom_call.1} parent=15 // pred_check
          %p161 = pneg %p56
        $region18: #{tpu_custom_call.1} parent=15 // pred_check_branch
          %163 = sbr.rel (%p161) target = $region20
        $region19: #{tpu_custom_call.1} parent=15 // pred_region
          %s164 = sand.u32 %s46, 1
          %s165 = scalar_lea.sflag [#allocation3], %s164
          %s166 = sand.u32 %s46, 1
          %s167 = smul.addr %s166, 64
          %s168 = scalar_lea.vmem [#allocation2], %s167
          %s169 = sadd.s32 %s29, %s30
          %s171 = ssub.s32 1024, 1024
          %172 = vsyncadd %s165, %s171
          %s173 = smul.addr %s169, 8
          %s174 = smul.addr %s173, 128
          %s175 = scalar_lea.hbm %s0, %s174
          %s177 = sshll.u32 %s168, 4
          %s178 = int_to_ptr.vmem [resolvable:$true] %s177
          %180 = dma.hbm_to_vmem [thread:$0]  %s175, 1024, %s178, %s165
        $region20: #{tpu_custom_call.1} parent=15 // pred_fallthru
          _
        // Predicated region
        $region21: #{tpu_custom_call.1} parent=15 // pred_check
          %p181 = pneg %p84
        $region22: #{tpu_custom_call.1} parent=15 // pred_check_branch
          %183 = sbr.rel (%p181) target = $region24
        $region23: #{tpu_custom_call.1} parent=15 // pred_region
          %s184 = sand.u32 %s74, 1
          %s185 = scalar_lea.sflag [#allocation6], %s184
          %s186 = sand.u32 %s74, 1
          %s187 = smul.addr %s186, 64
          %s188 = scalar_lea.vmem [#allocation5], %s187
          %s189 = sadd.s32 %s29, %s30
          %s191 = ssub.s32 1024, 1024
          %192 = vsyncadd %s185, %s191
          %s193 = smul.addr %s189, 8
          %s194 = smul.addr %s193, 128
          %s195 = scalar_lea.hbm %s1, %s194
          %s197 = sshll.u32 %s188, 4
          %s198 = int_to_ptr.vmem [resolvable:$true] %s197
          %200 = dma.hbm_to_vmem [thread:$0]  %s195, 1024, %s198, %s185
        $region24: #{tpu_custom_call.1} parent=15 // pred_fallthru
          _
      $region16: #{tpu_custom_call.1} parent=5 // pred_fallthru
        _
      %p201 = scmp.le.s32.totalorder 1, %s22
      %p202 = scmp.lt.s32.totalorder %s22, 3
      %p203 = pnand %p201, %p202
      %p204 = pneg %p203
      // Predicated region
      $region25: #{tpu_custom_call.1} parent=5 // pred_check
        _
      $region26: #{tpu_custom_call.1} parent=5 // pred_check_branch
        %206 = sbr.rel (%p203) target = $region28
      $region27: #{tpu_custom_call.1} parent=5 // pred_region
        %s207 = ssub.s32 %s22, 1
        %s208 = sand.u32 %s49, 1
        %s209 = scalar_lea.sflag [#allocation3], %s208
        %s210 = sand.u32 %s49, 1
        %s211 = smul.addr %s210, 64
        %s212 = scalar_lea.vmem [#allocation2], %s211
        // Predicated region
        $region29: #{tpu_custom_call.1} parent=27 // pred_check
          %p213 = pneg %p62
        $region30: #{tpu_custom_call.1} parent=27 // pred_check_branch
          %215 = sbr.rel (%p213) target = $region32
        $region31: #{tpu_custom_call.1} parent=27 // pred_region
          %216 = dma.done %s209, 1024
        $region32: #{tpu_custom_call.1} parent=27 // pred_fallthru
          _
        %s217 = sand.u32 %s77, 1
        %s218 = scalar_lea.sflag [#allocation6], %s217
        %s219 = sand.u32 %s77, 1
        %s220 = smul.addr %s219, 64
        %s221 = scalar_lea.vmem [#allocation5], %s220
        // Predicated region
        $region33: #{tpu_custom_call.1} parent=27 // pred_check
          %p222 = pneg %p90
        $region34: #{tpu_custom_call.1} parent=27 // pred_check_branch
          %224 = sbr.rel (%p222) target = $region36
        $region35: #{tpu_custom_call.1} parent=27 // pred_region
          %225 = dma.done %s218, 1024
        $region36: #{tpu_custom_call.1} parent=27 // pred_fallthru
          _
        %s226 = sand.u32 %s49, 1
        %s227 = scalar_lea.sflag [#allocation3], %s226
        %s228 = sand.u32 %s49, 1
        %s229 = smul.addr %s228, 64
        %s230 = scalar_lea.vmem [#allocation2], %s229
        %p231 = pneg %p62
        %p232 = pneg %p59
        %s233 = sand.u32 %s77, 1
        %s234 = scalar_lea.sflag [#allocation6], %s233
        %s235 = sand.u32 %s77, 1
        %s236 = smul.addr %s235, 64
        %s237 = scalar_lea.vmem [#allocation5], %s236
        %p238 = pneg %p90
        %p239 = pneg %p87
        %p240 = pneg %p116
        %p241 = pneg %p113
        %s242 = sand.u32 %s103, 1
        %s243 = scalar_lea.sflag [#allocation4], %s242
        %s244 = sand.u32 %s103, 1
        %s245 = smul.addr %s244, 64
        %s246 = scalar_lea.vmem [#allocation7], %s245
        %p247 = pneg %p142
        %p248 = pneg %p139
        %s249 = sand.u32 %s129, 1
        %s250 = scalar_lea.sflag [#allocation9], %s249
        %s251 = sand.u32 %s129, 1
        %s252 = smul.addr %s251, 64
        %s253 = scalar_lea.vmem [#allocation8], %s252
        %s254 = sadd.s32 %s31, %s32
        %s255 = sadd.s32 %s31, %s32
        %p256 = scmp.eq.s32.totalorder %s32, 0
        // Predicated region
        $region37: #{tpu_custom_call.1} parent=27 // pred_check
          %p257 = pneg %p256
        $region38: #{tpu_custom_call.1} parent=27 // pred_check_branch
          %259 = sbr.rel (%p257) target = $region40
        $region39: #{tpu_custom_call.1} parent=27 // pred_region
          %260 = vst [vmem:[%s246] sm:$0xff] 0.0
          %261 = vst [vmem:[%s246 + $0x8] sm:$0xff] 0.0
          %262 = vst [vmem:[%s246 + $0x10] sm:$0xff] 0.0
          %263 = vst [vmem:[%s246 + $0x18] sm:$0xff] 0.0
          %264 = vst [vmem:[%s246 + $0x20] sm:$0xff] 0.0
          %265 = vst [vmem:[%s246 + $0x28] sm:$0xff] 0.0
          %266 = vst [vmem:[%s246 + $0x30] sm:$0xff] 0.0
          %267 = vst [vmem:[%s246 + $0x38] sm:$0xff] 0.0
          %268 = vst [vmem:[%s253] sm:$0xff] 0.0
          %269 = vst [vmem:[%s253 + $0x8] sm:$0xff] 0.0
          %270 = vst [vmem:[%s253 + $0x10] sm:$0xff] 0.0
          %271 = vst [vmem:[%s253 + $0x18] sm:$0xff] 0.0
          %272 = vst [vmem:[%s253 + $0x20] sm:$0xff] 0.0
          %273 = vst [vmem:[%s253 + $0x28] sm:$0xff] 0.0
          %274 = vst [vmem:[%s253 + $0x30] sm:$0xff] 0.0
          %275 = vst [vmem:[%s253 + $0x38] sm:$0xff] 0.0
        $region40: #{tpu_custom_call.1} parent=27 // pred_fallthru
          _
        %v276 = vld [vmem:[%s212] sm:$0xff]
        %v277 = vld [vmem:[%s212 + $0x8] sm:$0xff]
        %v278 = vld [vmem:[%s212 + $0x10] sm:$0xff]
        %v279 = vld [vmem:[%s212 + $0x18] sm:$0xff]
        %v280 = vld [vmem:[%s212 + $0x20] sm:$0xff]
        %v281 = vld [vmem:[%s212 + $0x28] sm:$0xff]
        %v282 = vld [vmem:[%s212 + $0x30] sm:$0xff]
        %v283 = vld [vmem:[%s212 + $0x38] sm:$0xff]
        %v284 = vxor.u32 %v276, 2147483648
        %v285 = vxor.u32 %v277, 2147483648
        %v286 = vxor.u32 %v278, 2147483648
        %v287 = vxor.u32 %v279, 2147483648
        %v288 = vxor.u32 %v280, 2147483648
        %v289 = vxor.u32 %v281, 2147483648
        %v290 = vxor.u32 %v282, 2147483648
        %v291 = vxor.u32 %v283, 2147483648
        %v292 = vmul.f32 %v284, 1.442695
        %v293 = vpow.pop %v292
        %v294 = vmul.f32 %v285, 1.442695
        %v295 = vpow.pop %v294
        %v296 = vmul.f32 %v286, 1.442695
        %v297 = vpow.pop %v296
        %v298 = vmul.f32 %v287, 1.442695
        %v299 = vpow.pop %v298
        %v300 = vmul.f32 %v288, 1.442695
        %v301 = vpow.pop %v300
        %v302 = vmul.f32 %v289, 1.442695
        %v303 = vpow.pop %v302
        %v304 = vmul.f32 %v290, 1.442695
        %v305 = vpow.pop %v304
        %v306 = vmul.f32 %v291, 1.442695
        %v307 = vpow.pop %v306
        %v308 = vadd.f32 %v293, 1.0
        %v309 = vadd.f32 %v295, 1.0
        %v310 = vadd.f32 %v297, 1.0
        %v311 = vadd.f32 %v299, 1.0
        %v312 = vadd.f32 %v301, 1.0
        %v313 = vadd.f32 %v303, 1.0
        %v314 = vadd.f32 %v305, 1.0
        %v315 = vadd.f32 %v307, 1.0
        %v316 = vrcp.pop %v308
        %v317 = vmul.f32 1.0, %v316
        %v318 = vrcp.pop %v309
        %v319 = vmul.f32 1.0, %v318
        %v320 = vrcp.pop %v310
        %v321 = vmul.f32 1.0, %v320
        %v322 = vrcp.pop %v311
        %v323 = vmul.f32 1.0, %v322
        %v324 = vrcp.pop %v312
        %v325 = vmul.f32 1.0, %v324
        %v326 = vrcp.pop %v313
        %v327 = vmul.f32 1.0, %v326
        %v328 = vrcp.pop %v314
        %v329 = vmul.f32 1.0, %v328
        %v330 = vrcp.pop %v315
        %v331 = vmul.f32 1.0, %v330
        %v332 = vld [vmem:[%s221] sm:$0xff]
        %v333 = vld [vmem:[%s221 + $0x8] sm:$0xff]
        %v334 = vld [vmem:[%s221 + $0x10] sm:$0xff]
        %v335 = vld [vmem:[%s221 + $0x18] sm:$0xff]
        %v336 = vld [vmem:[%s221 + $0x20] sm:$0xff]
        %v337 = vld [vmem:[%s221 + $0x28] sm:$0xff]
        %v338 = vld [vmem:[%s221 + $0x30] sm:$0xff]
        %v339 = vld [vmem:[%s221 + $0x38] sm:$0xff]
        %v340 = vld [vmem:[%s246] sm:$0xff]
        %v341 = vld [vmem:[%s246 + $0x8] sm:$0xff]
        %v342 = vld [vmem:[%s246 + $0x10] sm:$0xff]
        %v343 = vld [vmem:[%s246 + $0x18] sm:$0xff]
        %v344 = vld [vmem:[%s246 + $0x20] sm:$0xff]
        %v345 = vld [vmem:[%s246 + $0x28] sm:$0xff]
        %v346 = vld [vmem:[%s246 + $0x30] sm:$0xff]
        %v347 = vld [vmem:[%s246 + $0x38] sm:$0xff]
        %v348 = vmul.f32 %v317, %v332
        %v349 = vmul.f32 %v319, %v333
        %v350 = vmul.f32 %v321, %v334
        %v351 = vmul.f32 %v323, %v335
        %v352 = vmul.f32 %v325, %v336
        %v353 = vmul.f32 %v327, %v337
        %v354 = vmul.f32 %v329, %v338
        %v355 = vmul.f32 %v331, %v339
        %v356 = vadd.f32 %v348, 0.0
        %v357 = vadd.f32 %v349, 0.0
        %v358 = vadd.f32 %v350, 0.0
        %v359 = vadd.f32 %v351, 0.0
        %v360 = vadd.f32 %v352, 0.0
        %v361 = vadd.f32 %v353, 0.0
        %v362 = vadd.f32 %v354, 0.0
        %v363 = vadd.f32 %v355, 0.0
        %v364 = vadd.f32 %v340, %v356
        %v365 = vadd.f32 %v341, %v357
        %v366 = vadd.f32 %v342, %v358
        %v367 = vadd.f32 %v343, %v359
        %v368 = vadd.f32 %v344, %v360
        %v369 = vadd.f32 %v345, %v361
        %v370 = vadd.f32 %v346, %v362
        %v371 = vadd.f32 %v347, %v363
        %372 = vst [vmem:[%s246] sm:$0xff] %v364
        %373 = vst [vmem:[%s246 + $0x8] sm:$0xff] %v365
        %374 = vst [vmem:[%s246 + $0x10] sm:$0xff] %v366
        %375 = vst [vmem:[%s246 + $0x18] sm:$0xff] %v367
        %376 = vst [vmem:[%s246 + $0x20] sm:$0xff] %v368
        %377 = vst [vmem:[%s246 + $0x28] sm:$0xff] %v369
        %378 = vst [vmem:[%s246 + $0x30] sm:$0xff] %v370
        %379 = vst [vmem:[%s246 + $0x38] sm:$0xff] %v371
        %v380 = vld [vmem:[%s253] sm:$0xff]
        %v381 = vld [vmem:[%s253 + $0x8] sm:$0xff]
        %v382 = vld [vmem:[%s253 + $0x10] sm:$0xff]
        %v383 = vld [vmem:[%s253 + $0x18] sm:$0xff]
        %v384 = vld [vmem:[%s253 + $0x20] sm:$0xff]
        %v385 = vld [vmem:[%s253 + $0x28] sm:$0xff]
        %v386 = vld [vmem:[%s253 + $0x30] sm:$0xff]
        %v387 = vld [vmem:[%s253 + $0x38] sm:$0xff]
        %v388 = vadd.f32 %v317, 0.0
        %v389 = vadd.f32 %v319, 0.0
        %v390 = vadd.f32 %v321, 0.0
        %v391 = vadd.f32 %v323, 0.0
        %v392 = vadd.f32 %v325, 0.0
        %v393 = vadd.f32 %v327, 0.0
        %v394 = vadd.f32 %v329, 0.0
        %v395 = vadd.f32 %v331, 0.0
        %v396 = vadd.f32 %v332, 0.0
        %v397 = vadd.f32 %v333, 0.0
        %v398 = vadd.f32 %v334, 0.0
        %v399 = vadd.f32 %v335, 0.0
        %v400 = vadd.f32 %v336, 0.0
        %v401 = vadd.f32 %v337, 0.0
        %v402 = vadd.f32 %v338, 0.0
        %v403 = vadd.f32 %v339, 0.0
        %v404 = vadd.f32 %v388, %v396
        %v405 = vadd.f32 %v389, %v397
        %v406 = vadd.f32 %v390, %v398
        %v407 = vadd.f32 %v391, %v399
        %v408 = vadd.f32 %v392, %v400
        %v409 = vadd.f32 %v393, %v401
        %v410 = vadd.f32 %v394, %v402
        %v411 = vadd.f32 %v395, %v403
        %v412 = vadd.f32 %v380, %v404
        %v413 = vadd.f32 %v381, %v405
        %v414 = vadd.f32 %v382, %v406
        %v415 = vadd.f32 %v383, %v407
        %v416 = vadd.f32 %v384, %v408
        %v417 = vadd.f32 %v385, %v409
        %v418 = vadd.f32 %v386, %v410
        %v419 = vadd.f32 %v387, %v411
        %420 = vst [vmem:[%s253] sm:$0xff] %v412
        %421 = vst [vmem:[%s253 + $0x8] sm:$0xff] %v413
        %422 = vst [vmem:[%s253 + $0x10] sm:$0xff] %v414
        %423 = vst [vmem:[%s253 + $0x18] sm:$0xff] %v415
        %424 = vst [vmem:[%s253 + $0x20] sm:$0xff] %v416
        %425 = vst [vmem:[%s253 + $0x28] sm:$0xff] %v417
        %426 = vst [vmem:[%s253 + $0x30] sm:$0xff] %v418
        %427 = vst [vmem:[%s253 + $0x38] sm:$0xff] %v419
        %s428 = sand.u32 %s103, 1
        %s429 = scalar_lea.sflag [#allocation4], %s428
        %s430 = sand.u32 %s103, 1
        %s431 = smul.addr %s430, 64
        %s432 = scalar_lea.vmem [#allocation7], %s431
        %s433 = sand.u32 %s129, 1
        %s434 = scalar_lea.sflag [#allocation9], %s433
        %s435 = sand.u32 %s129, 1
        %s436 = smul.addr %s435, 64
        %s437 = scalar_lea.vmem [#allocation8], %s436
        // Predicated region
        $region41: #{tpu_custom_call.1} parent=27 // pred_check
          %p438 = pneg %p113
        $region42: #{tpu_custom_call.1} parent=27 // pred_check_branch
          %440 = sbr.rel (%p438) target = $region44
        $region43: #{tpu_custom_call.1} parent=27 // pred_region
          %s442 = ssub.s32 1024, 1024
          %443 = vsyncadd %s429, %s442
          %s444 = smul.addr %s31, 8
          %s445 = smul.addr %s444, 128
          %s446 = scalar_lea.hbm %s2, %s445
          %s448 = sshll.u32 %s432, 4
          %s449 = int_to_ptr.vmem [resolvable:$true] %s448
          %451 = dma.vmem_to_hbm [thread:$0]  %s449, 1024, %s446, %s429
        $region44: #{tpu_custom_call.1} parent=27 // pred_fallthru
          _
        // Predicated region
        $region45: #{tpu_custom_call.1} parent=27 // pred_check
          %p452 = pneg %p139
        $region46: #{tpu_custom_call.1} parent=27 // pred_check_branch
          %454 = sbr.rel (%p452) target = $region48
        $region47: #{tpu_custom_call.1} parent=27 // pred_region
          %s456 = ssub.s32 1024, 1024
          %457 = vsyncadd %s434, %s456
          %s458 = smul.addr %s31, 8
          %s459 = smul.addr %s458, 128
          %s460 = scalar_lea.hbm %s3, %s459
          %s462 = sshll.u32 %s437, 4
          %s463 = int_to_ptr.vmem [resolvable:$true] %s462
          %465 = dma.vmem_to_hbm [thread:$0]  %s463, 1024, %s460, %s434
        $region48: #{tpu_custom_call.1} parent=27 // pred_fallthru
          _
      $region28: #{tpu_custom_call.1} parent=5 // pred_fallthru
        _
      %p466 = scmp.le.s32.totalorder 2, %s22
      // Predicated region
      $region49: #{tpu_custom_call.1} parent=5 // pred_check
        %p467 = pneg %p466
      $region50: #{tpu_custom_call.1} parent=5 // pred_check_branch
        %469 = sbr.rel (%p467) target = $region52
      $region51: #{tpu_custom_call.1} parent=5 // pred_region
        %s470 = ssub.s32 %s22, 2
        // Predicated region
        $region53: #{tpu_custom_call.1} parent=51 // pred_check
          %p471 = pneg %p119
        $region54: #{tpu_custom_call.1} parent=51 // pred_check_branch
          %473 = sbr.rel (%p471) target = $region56
        $region55: #{tpu_custom_call.1} parent=51 // pred_region
          %s474 = sand.u32 %s104, 1
          %s475 = scalar_lea.sflag [#allocation4], %s474
          %s476 = sand.u32 %s104, 1
          %s477 = smul.addr %s476, 64
          %s478 = scalar_lea.vmem [#allocation7], %s477
          %479 = dma.done %s475, 1024
        $region56: #{tpu_custom_call.1} parent=51 // pred_fallthru
          _
        // Predicated region
        $region57: #{tpu_custom_call.1} parent=51 // pred_check
          %p480 = pneg %p145
        $region58: #{tpu_custom_call.1} parent=51 // pred_check_branch
          %482 = sbr.rel (%p480) target = $region60
        $region59: #{tpu_custom_call.1} parent=51 // pred_region
          %s483 = sand.u32 %s130, 1
          %s484 = scalar_lea.sflag [#allocation9], %s483
          %s485 = sand.u32 %s130, 1
          %s486 = smul.addr %s485, 64
          %s487 = scalar_lea.vmem [#allocation8], %s486
          %488 = dma.done %s484, 1024
        $region60: #{tpu_custom_call.1} parent=51 // pred_fallthru
          _
      $region52: #{tpu_custom_call.1} parent=5 // pred_fallthru
        _
    $region6: #{tpu_custom_call.1} parent=1 // loop_footer
      %s26 = sadd.s32 1, %s22
    $region7: #{tpu_custom_call.1} parent=1 // loop_footer_branch
      %21 = sbr.rel target = $region3
    $region8: #{tpu_custom_call.1} parent=1 // loop_exit
      _
    %489 = vsyncpa [#allocation3], 1
    %s490 = scalar_lea.sflag [#allocation3], 1
    %491 = vsyncpa %s490, 1
    %492 = vsyncpa [#allocation6], 1
    %s493 = scalar_lea.sflag [#allocation6], 1
    %494 = vsyncpa %s493, 1
    %495 = vsyncpa [#allocation4], 1
    %s496 = scalar_lea.sflag [#allocation4], 1
    %497 = vsyncpa %s496, 1
    %498 = vsyncpa [#allocation9], 1
    %s499 = scalar_lea.sflag [#allocation9], 1
    %500 = vsyncpa %s499, 1

</llo_original>
